<compile_context>
chip_gen: v7x
topology: tpu7x:2x2x1
jax: 0.10.0
libtpu: 0.0.40
codegen_flags: <defaults>
</compile_context>

<pallas_src>
import math
from functools import partial

import jax
import jax.numpy as jnp
from jax.experimental import pallas as pl
from jax.experimental.pallas import tpu as pltpu

LANE = 128


def _round_up(x, m):
    return ((x + m - 1) // m) * m


def _reconstruct_kernel(rows_ref, w_ref, scale_ref, shift_ref, out_ref):
    # rows: (TILE_M, Kp)  w: (Kp, Cp)  scale/shift: (1, Cp)  out: (TILE_M, Cp)
    acc = jnp.dot(rows_ref[...], w_ref[...], preferred_element_type=jnp.float32)
    y = acc * scale_ref[...] + shift_ref[...]          # conv-bias + BN folded
    out_ref[...] = jnp.maximum(y, 0.0).astype(out_ref.dtype)   # ReLU


def _fused_matmul_affine_relu(rows, w_mat, scale, shift):
    """ReLU((rows @ w_mat) * scale + shift), tiled over rows, lane-padded."""
    M, K = rows.shape
    C = w_mat.shape[1]

    Kp = _round_up(K, LANE)
    Cp = _round_up(C, LANE)

    tile_m = 256                      # fits comfortably in 16/32 MiB scoped VMEM
    Mp = _round_up(M, 8)
    if Mp <= tile_m:
        tile_m = Mp
    else:
        Mp = _round_up(M, tile_m)

    rows_p = jnp.pad(rows, ((0, Mp - M), (0, Kp - K)))
    w_p = jnp.pad(w_mat, ((0, Kp - K), (0, Cp - C)))
    scale_p = jnp.pad(scale, (0, Cp - C)).reshape(1, Cp)
    shift_p = jnp.pad(shift, (0, Cp - C)).reshape(1, Cp)

    f32 = 4
    cost = pl.CostEstimate(
        flops=2 * Mp * Kp * Cp,
        transcendentals=0,
        bytes_accessed=f32 * (Mp * Kp + Kp * Cp + 2 * Cp + Mp * Cp),
    )

    out = pl.pallas_call(
        _reconstruct_kernel,
        out_shape=jax.ShapeDtypeStruct((Mp, Cp), rows.dtype),
        grid=(Mp // tile_m,),
        in_specs=[
            pl.BlockSpec((tile_m, Kp), lambda i: (i, 0)),   # row tiles (pipelined)
            pl.BlockSpec((Kp, Cp), lambda i: (0, 0)),       # weights, resident
            pl.BlockSpec((1, Cp), lambda i: (0, 0)),        # scale, resident
            pl.BlockSpec((1, Cp), lambda i: (0, 0)),        # shift, resident
        ],
        out_specs=pl.BlockSpec((tile_m, Cp), lambda i: (i, 0)),
        compiler_params=pltpu.CompilerParams(
            dimension_semantics=("parallel",),
            vmem_limit_bytes=32 * 1024 * 1024,
        ),
        cost_estimate=cost,
    )(rows_p, w_p, scale_p, shift_p)

    return out[:M, :C]


@partial(jax.jit, static_argnames=("kernel_size", "scale_factor"))
def _reconstruct_impl(x, conv_w, conv_b, bn_gamma, bn_beta, bn_mean, bn_var,
                      *, kernel_size, scale_factor, eps=1e-5):
    B, n_patch, hidden = x.shape
    h = int(math.sqrt(n_patch))
    w = h
    c_in = hidden
    c_out = conv_w.shape[0]
    sf = int(scale_factor)
    assert kernel_size in (1, 3), "Reconstruct is used with kernel_size 1 or 3"
    pad = 1 if kernel_size == 3 else 0

    # Fold conv bias + inference-mode BatchNorm into one per-channel affine.
    scale = bn_gamma / jnp.sqrt(bn_var + eps)
    shift = bn_beta - bn_mean * scale + conv_b * scale

    # Token map in NHWC (values identical to the PyTorch permute+view to NCHW).
    img = x.reshape(B, h, w, c_in)

    if kernel_size == 1:
        # 1x1 conv + per-channel affine + ReLU commute with nearest upsample:
        # run on the sf^2-times-smaller pre-upsample map, upsample afterwards.
        rows = img.reshape(B * h * w, c_in)
        w_mat = conv_w.reshape(c_out, c_in).T                       # (C_in, C_out)
        out = _fused_matmul_affine_relu(rows, w_mat, scale, shift)
        out = out.reshape(B, h, w, c_out)
        if sf > 1:
            out = jnp.repeat(jnp.repeat(out, sf, axis=1), sf, axis=2)
    else:
        H, W = h * sf, w * sf
        up = jnp.repeat(jnp.repeat(img, sf, axis=1), sf, axis=2)    # nearest
        xp = jnp.pad(up, ((0, 0), (pad, pad), (pad, pad), (0, 0)))
        # im2col: k*k shifted views concatenated on channel in (dy, dx, c) order.
        # TODO(synk): for production shapes, fold this im2col into the BlockSpec
        # index_map / manual halo DMA to avoid the k*k HBM expansion.
        cols = [xp[:, dy:dy + H, dx:dx + W, :]
                for dy in range(kernel_size) for dx in range(kernel_size)]
        rows = jnp.concatenate(cols, axis=-1).reshape(
            B * H * W, c_in * kernel_size * kernel_size)
        w_mat = conv_w.transpose(2, 3, 1, 0).reshape(               # (kh*kw*C_in, C_out)
            kernel_size * kernel_size * c_in, c_out)
        out = _fused_matmul_affine_relu(rows, w_mat, scale, shift)
        out = out.reshape(B, H, W, c_out)

    return out.transpose(0, 3, 1, 2)   # NCHW, like the PyTorch module


def reconstruct(x, conv_w, conv_b, bn_gamma, bn_beta, bn_mean, bn_var,
                *, kernel_size, scale_factor, eps=1e-5):
    if x is None:               # matches the module's early return
        return None
    return _reconstruct_impl(x, conv_w, conv_b, bn_gamma, bn_beta, bn_mean,
                             bn_var, kernel_size=kernel_size,
                             scale_factor=scale_factor, eps=eps)


def reconstruct_ref(x, conv_w, conv_b, gamma, beta, mean, var,
                    kernel_size, scale_factor, eps=1e-5):
    """Pure-JAX reference mirroring the PyTorch forward (inference BN)."""
    B, n_patch, hidden = x.shape
    h = int(math.sqrt(n_patch))
    xi = jnp.transpose(x, (0, 2, 1)).reshape(B, hidden, h, h)      # NCHW
    up = jnp.repeat(jnp.repeat(xi, scale_factor, axis=2), scale_factor, axis=3)
    pad = 1 if kernel_size == 3 else 0
    conv = jax.lax.conv_general_dilated(
        up, conv_w, window_strides=(1, 1),
        padding=((pad, pad), (pad, pad)),
        dimension_numbers=("NCHW", "OIHW", "NCHW"),
    ) + conv_b.reshape(1, -1, 1, 1)
    inv = gamma.reshape(1, -1, 1, 1) / jnp.sqrt(var.reshape(1, -1, 1, 1) + eps)
    bn = (conv - mean.reshape(1, -1, 1, 1)) * inv + beta.reshape(1, -1, 1, 1)
    return jnp.maximum(bn, 0.0)


if __name__ == "__main__":
    # Small shapes consistent with the module: tokens (B=2, n_patch=16,
    # hidden=4), out_channels=8.  Two configs exercise both conv paths and a
    # multi-tile grid (k=3, sf=4 -> M = 2*16*16 = 512 rows -> 2 row tiles).
    B, n_patch, c_in, c_out = 2, 16, 4, 8
    h = int(math.sqrt(n_patch))
    base_key = jax.random.PRNGKey(0)

    for kernel_size, scale_factor in ((1, 2), (3, 4)):
        keys = jax.random.split(jax.random.fold_in(base_key, kernel_size), 7)
        x = jax.random.normal(keys[0], (B, n_patch, c_in), jnp.float32)
        conv_w = 0.1 * jax.random.normal(
            keys[1], (c_out, c_in, kernel_size, kernel_size), jnp.float32)
        conv_b = 0.1 * jax.random.normal(keys[2], (c_out,), jnp.float32)
        gamma = 1.0 + 0.1 * jax.random.normal(keys[3], (c_out,), jnp.float32)
        beta = 0.1 * jax.random.normal(keys[4], (c_out,), jnp.float32)
        mean = 0.1 * jax.random.normal(keys[5], (c_out,), jnp.float32)
        var = 0.5 + jax.random.uniform(keys[6], (c_out,), jnp.float32)

        out = reconstruct(x, conv_w, conv_b, gamma, beta, mean, var,
                          kernel_size=kernel_size, scale_factor=scale_factor)
        jax.block_until_ready(out)

        ref = reconstruct_ref(x, conv_w, conv_b, gamma, beta, mean, var,
                              kernel_size, scale_factor)
        H = h * scale_factor
        assert out.shape == (B, c_out, H, H), out.shape
        assert jnp.allclose(out, ref, atol=1e-4, rtol=1e-4), \
            f"mismatch vs reference (kernel_size={kernel_size})"

    print("KERNEL_OK")
</pallas_src>

<mosaic_0001>
module attributes {stable_mosaic.version = 11 : i64} {
  func.func @_reconstruct_kernel(%arg0: i32, %arg1: memref<32x128xf32, #tpu.memory_space<vmem>>, %arg2: memref<128x128xf32, #tpu.memory_space<vmem>>, %arg3: memref<1x128xf32, #tpu.memory_space<vmem>>, %arg4: memref<1x128xf32, #tpu.memory_space<vmem>>, %arg5: memref<32x128xf32, #tpu.memory_space<vmem>>) attributes {dimension_semantics = [#tpu.dimension_semantics<parallel>], iteration_bounds = array<i64: 1>, scalar_prefetch = 0 : i64, scratch_operands = 0 : i64, tpu.core_type = #tpu.core_type<tc>, window_params = [{transform_indices = @transform_0, window_bounds = array<i64: 32, 128>}, {pipeline_mode = #tpu.pipeline_mode<synchronous>, transform_indices = @transform_1, window_bounds = array<i64: 128, 128>}, {pipeline_mode = #tpu.pipeline_mode<synchronous>, transform_indices = @transform_2, window_bounds = array<i64: 1, 128>}, {pipeline_mode = #tpu.pipeline_mode<synchronous>, transform_indices = @transform_3, window_bounds = array<i64: 1, 128>}, {transform_indices = @transform_4, window_bounds = array<i64: 32, 128>}]} {
    %c0 = arith.constant 0 : index
    %c0_0 = arith.constant 0 : index
    %0 = vector.load %arg1[%c0, %c0_0] : memref<32x128xf32, #tpu.memory_space<vmem>>, vector<32x128xf32>
    %c0_1 = arith.constant 0 : index
    %c0_2 = arith.constant 0 : index
    %1 = vector.load %arg2[%c0_1, %c0_2] : memref<128x128xf32, #tpu.memory_space<vmem>>, vector<128x128xf32>
    %cst = arith.constant dense<0.000000e+00> : vector<32x128xf32>
    %2 = tpu.matmul %0, %1, %cst {dimension_numbers = #tpu.dot_dimension_numbers<[1], [0], [0], [1], [0, 0, 1, 1], [], []>} : vector<32x128xf32>, vector<128x128xf32>, vector<32x128xf32> -> vector<32x128xf32>
    %c0_3 = arith.constant 0 : index
    %c0_4 = arith.constant 0 : index
    %3 = vector.load %arg3[%c0_3, %c0_4] : memref<1x128xf32, #tpu.memory_space<vmem>>, vector<1x128xf32>
    %4 = vector.broadcast %3 : vector<1x128xf32> to vector<32x128xf32>
    %5 = arith.mulf %2, %4 : vector<32x128xf32>
    %c0_5 = arith.constant 0 : index
    %c0_6 = arith.constant 0 : index
    %6 = vector.load %arg4[%c0_5, %c0_6] : memref<1x128xf32, #tpu.memory_space<vmem>>, vector<1x128xf32>
    %7 = vector.broadcast %6 : vector<1x128xf32> to vector<32x128xf32>
    %8 = arith.addf %5, %7 : vector<32x128xf32>
    %cst_7 = arith.constant 0.000000e+00 : f32
    %9 = vector.broadcast %cst_7 : f32 to vector<32x128xf32>
    %10 = arith.maximumf %8, %9 : vector<32x128xf32>
    %c0_8 = arith.constant 0 : index
    %c0_9 = arith.constant 0 : index
    %11 = vector.load %arg5[%c0_8, %c0_9] : memref<32x128xf32, #tpu.memory_space<vmem>>, vector<32x128xf32>
    tpu.vector_store %arg5[%c0_8, %c0_9], %10 {strides = array<i32>} : memref<32x128xf32, #tpu.memory_space<vmem>>, vector<32x128xf32>,
    return
  }
  func.func @transform_0(%arg0: i32) -> (i32, i32) {
    %c0_i32 = arith.constant 0 : i32
    %c0_i32_0 = arith.constant 0 : i32
    return %arg0, %c0_i32 : i32, i32
  }
  func.func @transform_1(%arg0: i32) -> (i32, i32) {
    %c0_i32 = arith.constant 0 : i32
    %c0_i32_0 = arith.constant 0 : i32
    %c0_i32_1 = arith.constant 0 : i32
    return %c0_i32, %c0_i32_0 : i32, i32
  }
  func.func @transform_2(%arg0: i32) -> (i32, i32) {
    %c0_i32 = arith.constant 0 : i32
    %c0_i32_0 = arith.constant 0 : i32
    %c0_i32_1 = arith.constant 0 : i32
    return %c0_i32, %c0_i32_0 : i32, i32
  }
  func.func @transform_3(%arg0: i32) -> (i32, i32) {
    %c0_i32 = arith.constant 0 : i32
    %c0_i32_0 = arith.constant 0 : i32
    %c0_i32_1 = arith.constant 0 : i32
    return %c0_i32, %c0_i32_0 : i32, i32
  }
  func.func @transform_4(%arg0: i32) -> (i32, i32) {
    %c0_i32 = arith.constant 0 : i32
    %c0_i32_0 = arith.constant 0 : i32
    return %arg0, %c0_i32 : i32, i32
  }
}

</mosaic_0001>

<llo_original>
// kernel: _reconstruct_impl.1
$region0: #{_reconstruct_impl.1}
  #allocation0 [shape = 'u32[]', space=smem, size = 0x4, offset = 0x4, fixed_abs, tag = 'smem constant byte address 0x4 - core index']
  #allocation1 [shape = 'u32[144,128]{1,0:T(1,128)}', space=vmem, size = 0x12000, scoped, tag = 'internal scratch']
  %s0 = inlined_call_operand.vmem [shape: f32[32,128], index: 0, kind: input, shape index: {}]
  %s1 = inlined_call_operand.vmem [shape: f32[128,128], index: 1, kind: input, shape index: {}]
  %s2 = inlined_call_operand.vmem [shape: f32[1,128], index: 2, kind: input, shape index: {}]
  %s3 = inlined_call_operand.vmem [shape: f32[1,128], index: 3, kind: input, shape index: {}]
  %s4 = inlined_call_operand.vmem [shape: f32[32,128], index: 4, kind: output, shape index: {}]
  %s5 = sld [smem:[#allocation0]]
  $region26: #{_reconstruct_impl.1} parent=0
    _
  %s7 = ssub.s32 1, %s5
  %s8 = scalar_select 0, %s7, %s5
  // Predicated region
  $region2: #{_reconstruct_impl.1} parent=0 // pred_check
    _
  $region3: #{_reconstruct_impl.1} parent=0 // pred_check_branch
    %10 = sbr.rel (0) target = $region5
  $region4: #{_reconstruct_impl.1} parent=0 // pred_region
    _
  $region5: #{_reconstruct_impl.1} parent=0 // pred_fallthru
    _
  // Predicated region
  $region6: #{_reconstruct_impl.1} parent=0 // pred_check
    _
  $region7: #{_reconstruct_impl.1} parent=0 // pred_check_branch
    %12 = sbr.rel (0) target = $region9
  $region8: #{_reconstruct_impl.1} parent=0 // pred_region
    _
  $region9: #{_reconstruct_impl.1} parent=0 // pred_fallthru
    _
  // Predicated region
  $region10: #{_reconstruct_impl.1} parent=0 // pred_check
    _
  $region11: #{_reconstruct_impl.1} parent=0 // pred_check_branch
    %14 = sbr.rel (0) target = $region13
  $region12: #{_reconstruct_impl.1} parent=0 // pred_region
    _
  $region13: #{_reconstruct_impl.1} parent=0 // pred_fallthru
    _
  // Predicated region
  $region14: #{_reconstruct_impl.1} parent=0 // pred_check
    _
  $region15: #{_reconstruct_impl.1} parent=0 // pred_check_branch
    %16 = sbr.rel (0) target = $region17
  $region16: #{_reconstruct_impl.1} parent=0 // pred_region
    _
  $region17: #{_reconstruct_impl.1} parent=0 // pred_fallthru
    _
  %v17 = vld [vmem:[%s0] sm:$0xff]
  %v18 = vld [vmem:[%s0 + $0x8] sm:$0xff]
  %v19 = vld [vmem:[%s0 + $0x10] sm:$0xff]
  %v20 = vld [vmem:[%s0 + $0x18] sm:$0xff]
  %v21 = vld [vmem:[%s1] sm:$0xff]
  %v22 = vld [vmem:[%s1 + $0x8] sm:$0xff]
  %v23 = vld [vmem:[%s1 + $0x10] sm:$0xff]
  %v24 = vld [vmem:[%s1 + $0x18] sm:$0xff]
  %v25 = vld [vmem:[%s1 + $0x20] sm:$0xff]
  %v26 = vld [vmem:[%s1 + $0x28] sm:$0xff]
  %v27 = vld [vmem:[%s1 + $0x30] sm:$0xff]
  %v28 = vld [vmem:[%s1 + $0x38] sm:$0xff]
  %v29 = vld [vmem:[%s1 + $0x40] sm:$0xff]
  %v30 = vld [vmem:[%s1 + $0x48] sm:$0xff]
  %v31 = vld [vmem:[%s1 + $0x50] sm:$0xff]
  %v32 = vld [vmem:[%s1 + $0x58] sm:$0xff]
  %v33 = vld [vmem:[%s1 + $0x60] sm:$0xff]
  %v34 = vld [vmem:[%s1 + $0x68] sm:$0xff]
  %v35 = vld [vmem:[%s1 + $0x70] sm:$0xff]
  %v36 = vld [vmem:[%s1 + $0x78] sm:$0xff]
  %37 = vmatprep.subr.mxu0 0.0
  %38 = vmatpush1.msra.mxu0 %v21
  %39 = vmatprep.subr.mxu0 0.0
  %40 = vmatpush1.msra.mxu0 %v22
  %41 = vmatprep.subr.mxu0 0.0
  %42 = vmatpush1.msra.mxu0 %v23
  %43 = vmatprep.subr.mxu0 0.0
  %44 = vmatpush1.msra.mxu0 %v24
  %45 = vmatprep.subr.mxu0 0.0
  %46 = vmatpush1.msra.mxu0 %v25
  %47 = vmatprep.subr.mxu0 0.0
  %48 = vmatpush1.msra.mxu0 %v26
  %49 = vmatprep.subr.mxu0 0.0
  %50 = vmatpush1.msra.mxu0 %v27
  %51 = vmatprep.subr.mxu0 0.0
  %52 = vmatpush1.msra.mxu0 %v28
  %53 = vmatprep.subr.mxu0 0.0
  %54 = vmatpush1.msra.mxu0 %v29
  %55 = vmatprep.subr.mxu0 0.0
  %56 = vmatpush1.msra.mxu0 %v30
  %57 = vmatprep.subr.mxu0 0.0
  %58 = vmatpush1.msra.mxu0 %v31
  %59 = vmatprep.subr.mxu0 0.0
  %60 = vmatpush1.msra.mxu0 %v32
  %61 = vmatprep.subr.mxu0 0.0
  %62 = vmatpush1.msra.mxu0 %v33
  %63 = vmatprep.subr.mxu0 0.0
  %64 = vmatpush1.msra.mxu0 %v34
  %65 = vmatprep.subr.mxu0 0.0
  %66 = vmatpush1.msra.mxu0 %v35
  %67 = vmatprep.subr.mxu0 0.0
  %68 = vmatpush1.msra.mxu0 %v36
  %69 = vmatprep.subr.mxu0 0.0
  %70 = vmatpush1.msra.mxu0 0.0
  %71 = vmatprep.subr.mxu0 0.0
  %72 = vmatpush1.msra.mxu0 0.0
  %73 = vmatprep.subr.mxu0 0.0
  %74 = vmatpush1.msra.mxu0 0.0
  %75 = vmatprep.subr.mxu0 0.0
  %76 = vmatpush1.msra.mxu0 0.0
  %77 = vmatprep.subr.mxu0 0.0
  %78 = vmatpush1.msra.mxu0 0.0
  %79 = vmatprep.subr.mxu0 0.0
  %80 = vmatpush1.msra.mxu0 0.0
  %81 = vmatprep.subr.mxu0 0.0
  %82 = vmatpush1.msra.mxu0 0.0
  %83 = vmatprep.subr.mxu0 0.0
  %84 = vmatpush1.msra.mxu0 0.0
  %85 = vmatprep.subr.mxu0 0.0
  %86 = vmatpush1.msra.mxu0 0.0
  %87 = vmatprep.subr.mxu0 0.0
  %88 = vmatpush1.msra.mxu0 0.0
  %89 = vmatprep.subr.mxu0 0.0
  %90 = vmatpush1.msra.mxu0 0.0
  %91 = vmatprep.subr.mxu0 0.0
  %92 = vmatpush1.msra.mxu0 0.0
  %93 = vmatprep.subr.mxu0 0.0
  %94 = vmatpush1.msra.mxu0 0.0
  %95 = vmatprep.subr.mxu0 0.0
  %96 = vmatpush1.msra.mxu0 0.0
  %97 = vmatprep.subr.mxu0 0.0
  %98 = vmatpush1.msra.mxu0 0.0
  %99 = vmatprep.subr.mxu0 0.0
  %100 = vmatpush1.msra.mxu0 0.0
  %101 = vmatprep.mubr.f32.mxu0 0.0
  %102 = vmatmul.mubr.f32.gmra.mrb[0].mxu0 %v17
  %v103 = vpop.f32.mrb[0].mxu0
  %v104 = vadd.f32 0.0, %v103
  %v105 = vpop.f32.mrb[0].mxu0
  %106 = vmatprep.mubr.f32.mxu0 0.0
  %107 = vmatmul.mubr.f32.gmra.mrb[0].mxu0 %v18
  %v108 = vpop.f32.mrb[0].mxu0
  %v109 = vadd.f32 0.0, %v108
  %v110 = vpop.f32.mrb[0].mxu0
  %111 = vmatprep.mubr.f32.mxu0 0.0
  %112 = vmatmul.mubr.f32.gmra.mrb[0].mxu0 %v19
  %v113 = vpop.f32.mrb[0].mxu0
  %v114 = vadd.f32 0.0, %v113
  %v115 = vpop.f32.mrb[0].mxu0
  %116 = vmatprep.mubr.f32.mxu0 0.0
  %117 = vmatmul.mubr.f32.gmra.mrb[0].mxu0 %v20
  %v118 = vpop.f32.mrb[0].mxu0
  %v119 = vadd.f32 0.0, %v118
  %v120 = vpop.f32.mrb[0].mxu0
  %121 = vdwg.mxu0
  %v122 = vld [vmem:[%s2] sm:$0x1]
  %v124 = vlaneseq
  %v125 = vshrl.u32 %v124, 7
  %v126 = vsub.s32 0, %v125
  %v127 = vrot.slane %v122, %v126
  %v129 = vmul.f32 %v104, %v127
  %v130 = vmul.f32 %v109, %v127
  %v131 = vmul.f32 %v114, %v127
  %v132 = vmul.f32 %v119, %v127
  %v133 = vld [vmem:[%s3] sm:$0x1]
  %v135 = vlaneseq
  %v136 = vshrl.u32 %v135, 7
  %v137 = vsub.s32 0, %v136
  %v138 = vrot.slane %v133, %v137
  %v140 = vadd.f32 %v129, %v138
  %v141 = vadd.f32 %v130, %v138
  %v142 = vadd.f32 %v131, %v138
  %v143 = vadd.f32 %v132, %v138
  %v144 = vmax.f32 %v140, 0.0
  %v145 = vmax.f32 %v141, 0.0
  %v146 = vmax.f32 %v142, 0.0
  %v147 = vmax.f32 %v143, 0.0
  %148 = vst [vmem:[%s4] sm:$0xff] %v144
  %149 = vst [vmem:[%s4 + $0x8] sm:$0xff] %v145
  %150 = vst [vmem:[%s4 + $0x10] sm:$0xff] %v146
  %151 = vst [vmem:[%s4 + $0x18] sm:$0xff] %v147
  // Predicated region
  $region18: #{_reconstruct_impl.1} parent=0 // pred_check
    _
  $region19: #{_reconstruct_impl.1} parent=0 // pred_check_branch
    %153 = sbr.rel (0) target = $region21
  $region20: #{_reconstruct_impl.1} parent=0 // pred_region
    _
  $region21: #{_reconstruct_impl.1} parent=0 // pred_fallthru
    _
  // Predicated region
  $region22: #{_reconstruct_impl.1} parent=0 // pred_check
    _
  $region23: #{_reconstruct_impl.1} parent=0 // pred_check_branch
    %155 = sbr.rel (0) target = $region25
  $region24: #{_reconstruct_impl.1} parent=0 // pred_region
    _
  $region25: #{_reconstruct_impl.1} parent=0 // pred_fallthru
    _

</llo_original>
